<compile_context>
chip_gen: v5e
topology: v5e:2x2
jax: 0.10.0
libtpu: 0.0.40
codegen_flags: <defaults>
</compile_context>

<pallas_src>
import functools

import jax
import jax.numpy as jnp
from jax import lax
from jax.experimental import pallas as pl
from jax.experimental.pallas import tpu as pltpu


def _round_up(v, m):
    return ((v + m - 1) // m) * m


def _qbit_kernel(x_ref, cb_ref, out_ref, bits_ref):
    # x_ref:    (TM, D)     token tile (features on lanes)
    # cb_ref:   (2, D)      codebook (resident; same block every grid step)
    # out_ref:  (TM, D)
    # bits_ref: (1, 1, TM)  lane-dense bits for this tile
    x = x_ref[...]                         # (TM, D)
    cb = cb_ref[...]                       # (2, D)
    cb0 = cb[0:1, :]                       # (1, D)
    cb1 = cb[1:2, :]                       # (1, D)

    # sim[m, n] = sum_d x[m, d] * codebook[n, d]  (lane reductions on VPU/XLU).
    # Two separate reductions keep the argmax tie rule exact (sim1 > sim0 -> 1).
    sim0 = jnp.sum(x * cb0, axis=-1, keepdims=True)   # (TM, 1)
    sim1 = jnp.sum(x * cb1, axis=-1, keepdims=True)   # (TM, 1)
    bits_col = sim1 > sim0                            # (TM, 1) bool

    # out = one_hot(bits) @ codebook == per-token codebook-row select.
    out_ref[...] = jnp.where(bits_col, cb1, cb0).astype(out_ref.dtype)

    # Lane-dense bits: relayout the (TM, 1) sublane column into a (1, TM) lane
    # row with a tiny MXU matmul (the q @ k.T dot_general pattern).  cnt[0, m]
    # is exactly 0 or D (sum of 0/1 values), so the > 0.5 compare is exact and
    # bits are guaranteed consistent with `out`.  Compute is fully hidden
    # under the HBM DMA.
    tm, d = x.shape
    ones_row = jnp.ones((1, d), dtype=jnp.float32)
    bits_mat = bits_col.astype(jnp.float32) * ones_row            # (TM, D)
    cnt = lax.dot_general(
        ones_row, bits_mat,
        dimension_numbers=(((1,), (1,)), ((), ())),
        preferred_element_type=jnp.float32)                       # (1, TM)
    bits_ref[0] = (cnt > 0.5).astype(jnp.int32)                   # (1, TM)


def _choose_tm(n_tokens, d, target_bytes=1 << 20, max_rows=2048):
    """Token-tile rows: padded f32 x-tile ~ target_bytes, capped at max_rows.

    Padding-aware: the minor dim occupies 128 lanes regardless of d.  HBM
    roofline saturates around 512-1024 rows; bigger tiles only burn VMEM.
    """
    d_padded = _round_up(max(d, 1), 128)
    tm = target_bytes // (4 * d_padded)
    tm = max(8, min(max_rows, (tm // 8) * 8))     # multiple of 8 sublanes
    if tm >= n_tokens:
        return n_tokens                           # single full tile
    return tm


def _vmem_need_bytes(tm, d):
    """Padding-aware VMEM footprint: double-buffered x/out/bits/codebook tiles."""
    d_padded = _round_up(max(d, 1), 128)
    tm_sub = _round_up(tm, 8)
    tm_lanes = _round_up(tm, 128)
    x_buf = tm_sub * d_padded * 4
    out_buf = x_buf
    bits_buf = 8 * tm_lanes * 4                   # (1, 1, TM) i32, sublane-padded
    cb_buf = 8 * d_padded * 4
    return 2 * (x_buf + out_buf + bits_buf + cb_buf)


def _vmem_limit_bytes(need_bytes):
    """Per-generation scoped-VMEM limit: headroom, but <= half of physical VMEM."""
    try:
        info = pltpu.get_tpu_info()
        phys = getattr(info, "vmem_capacity_bytes", None) or (64 * 2**20)
    except Exception:
        phys = 64 * 2**20                         # v7x physical; v5e/v6e have 128 MiB
    return int(min(max(4 * need_bytes, 16 * 2**20), phys // 2))


def qbit_layer_forward(x, codebook, num_bits):
    """Eval-mode forward of QBitLayer. x: (B, M, D) f32, codebook: (2, D) f32."""
    B, M, D = x.shape
    assert M % num_bits == 0, "input must be divisible by num_bits"
    assert num_bits <= 31, "int32 index packing supports at most 31 bits per group"
    G = M // num_bits

    # Collapse (B, M) into one token axis -> one trivially-parallel grid axis.
    N = B * M
    x2 = x.reshape(N, D)

    TM = _choose_tm(N, D)
    num_tiles = pl.cdiv(N, TM)

    need = _vmem_need_bytes(TM, D)
    vmem_limit = _vmem_limit_bytes(need)
    assert need <= vmem_limit, (
        f"padded tile footprint {need} B exceeds VMEM limit {vmem_limit} B")

    cost = pl.CostEstimate(
        flops=6 * N * D,                               # sims + select + relayout
        transcendentals=0,
        bytes_accessed=2 * N * D * 4 + N * 4 + 2 * D * 4,
    )

    out2, bits3 = pl.pallas_call(
        _qbit_kernel,
        out_shape=(
            jax.ShapeDtypeStruct((N, D), jnp.float32),
            jax.ShapeDtypeStruct((num_tiles, 1, TM), jnp.int32),
        ),
        grid=(num_tiles,),
        in_specs=[
            pl.BlockSpec((TM, D), lambda t: (t, 0)),
            pl.BlockSpec((2, D), lambda t: (0, 0)),    # resident codebook
        ],
        out_specs=(
            pl.BlockSpec((TM, D), lambda t: (t, 0)),
            pl.BlockSpec((1, 1, TM), lambda t: (t, 0, 0)),
        ),
        compiler_params=pltpu.CompilerParams(
            dimension_semantics=("parallel",),
            vmem_limit_bytes=vmem_limit,
        ),
        cost_estimate=cost,
    )(x2, codebook)

    out = out2.reshape(B, M, D)
    # Drop the (write-only) ragged tail of the last tile, if any.
    bits_flat = bits3.reshape(num_tiles * TM)[:N].reshape(B, M)    # (B, M) i32

    # Exact integer bit packing in the wrapper (trivial XLA op; no f32 rounding,
    # no extra HBM traffic through the kernel).
    bitmask = (2 ** jnp.arange(num_bits - 1, -1, -1)).astype(jnp.int32)
    indices = jnp.sum(bits_flat.reshape(B, G, num_bits) * bitmask, axis=-1)
    indices = indices.astype(jnp.int32)                            # (B, G)

    return out, dict(indices=indices, bits=bits_flat)


def qbit_layer_reference(x, codebook, num_bits):
    """Pure-JAX eval-mode reference (mirrors the PyTorch module)."""
    B, M, D = x.shape
    sim = jnp.einsum("bmd,nd->bmn", x, codebook)              # (B, M, 2)
    bits_flat = jnp.argmax(sim, axis=-1).astype(jnp.int32)    # (B, M)
    attn = jax.nn.one_hot(bits_flat, 2, dtype=jnp.float32)    # (B, M, 2)
    bitmask = (2 ** jnp.arange(num_bits - 1, -1, -1)).astype(jnp.int32)
    bits_grp = bits_flat.reshape(B, M // num_bits, num_bits)
    indices = jnp.sum(bitmask * bits_grp, axis=-1).astype(jnp.int32)
    out = jnp.einsum("bmn,nd->bmd", attn, codebook)
    return out, dict(indices=indices, bits=bits_flat)


if __name__ == "__main__":
    B, M, D = 2, 8, 32          # batch, tokens, features
    num_bits = 4                # M % num_bits == 0
    temperature = 1.0           # unused in eval mode

    key = jax.random.PRNGKey(0)
    kx, kc = jax.random.split(key)
    x = jax.random.normal(kx, (B, M, D), dtype=jnp.float32)
    codebook = jax.random.normal(kc, (2, D), dtype=jnp.float32)   # nn.Parameter(torch.randn(2, features))

    fwd = jax.jit(functools.partial(qbit_layer_forward, num_bits=num_bits))
    out, info = fwd(x, codebook)
    jax.block_until_ready((out, info["indices"], info["bits"]))

    # Sanity check against the pure-JAX reference.
    out_ref, info_ref = qbit_layer_reference(x, codebook, num_bits)
    assert jnp.allclose(out, out_ref, atol=1e-5, rtol=1e-5)
    assert jnp.array_equal(info["bits"], info_ref["bits"])
    assert jnp.array_equal(info["indices"], info_ref["indices"])

    print("KERNEL_OK")
</pallas_src>

<mosaic_0001>
module attributes {stable_mosaic.version = 11 : i64} {
  func.func @_qbit_kernel(%arg0: i32, %arg1: memref<16x32xf32, #tpu.memory_space<vmem>>, %arg2: memref<2x32xf32, #tpu.memory_space<vmem>>, %arg3: memref<16x32xf32, #tpu.memory_space<vmem>>, %arg4: memref<1x1x16xi32, #tpu.memory_space<vmem>>) attributes {dimension_semantics = [#tpu.dimension_semantics<parallel>], iteration_bounds = array<i64: 1>, scalar_prefetch = 0 : i64, scratch_operands = 0 : i64, tpu.core_type = #tpu.core_type<tc>, window_params = [{transform_indices = @transform_0, window_bounds = array<i64: 16, 32>}, {pipeline_mode = #tpu.pipeline_mode<synchronous>, transform_indices = @transform_1, window_bounds = array<i64: 2, 32>}, {transform_indices = @transform_2, window_bounds = array<i64: 16, 32>}, {transform_indices = @transform_3, window_bounds = array<i64: 1, 1, 16>}]} {
    %c0 = arith.constant 0 : index
    %c0_0 = arith.constant 0 : index
    %0 = vector.load %arg1[%c0, %c0_0] : memref<16x32xf32, #tpu.memory_space<vmem>>, vector<16x32xf32>
    %c0_1 = arith.constant 0 : index
    %c0_2 = arith.constant 0 : index
    %1 = vector.load %arg2[%c0_1, %c0_2] : memref<2x32xf32, #tpu.memory_space<vmem>>, vector<2x32xf32>
    %2 = vector.extract_strided_slice %1 {offsets = [0, 0], sizes = [1, 32], strides = [1, 1]} : vector<2x32xf32> to vector<1x32xf32>
    %3 = vector.extract_strided_slice %1 {offsets = [1, 0], sizes = [1, 32], strides = [1, 1]} : vector<2x32xf32> to vector<1x32xf32>
    %4 = vector.broadcast %2 : vector<1x32xf32> to vector<16x32xf32>
    %5 = arith.mulf %0, %4 : vector<16x32xf32>
    %cst = arith.constant dense<0.000000e+00> : vector<16xf32>
    %6 = vector.multi_reduction <add>, %5, %cst [1] : vector<16x32xf32> to vector<16xf32>
    %7 = vector.shape_cast %6 : vector<16xf32> to vector<16x1xf32>
    %8 = vector.broadcast %3 : vector<1x32xf32> to vector<16x32xf32>
    %9 = arith.mulf %0, %8 : vector<16x32xf32>
    %cst_3 = arith.constant dense<0.000000e+00> : vector<16xf32>
    %10 = vector.multi_reduction <add>, %9, %cst_3 [1] : vector<16x32xf32> to vector<16xf32>
    %11 = vector.shape_cast %10 : vector<16xf32> to vector<16x1xf32>
    %12 = arith.cmpf ogt, %11, %7 : vector<16x1xf32>
    %13 = vector.shape_cast %12 : vector<16x1xi1> to vector<16x1xi1>
    %14 = vector.broadcast %13 : vector<16x1xi1> to vector<16x32xi1>
    %15 = vector.shape_cast %3 : vector<1x32xf32> to vector<1x32xf32>
    %16 = vector.broadcast %15 : vector<1x32xf32> to vector<16x32xf32>
    %17 = vector.shape_cast %2 : vector<1x32xf32> to vector<1x32xf32>
    %18 = vector.broadcast %17 : vector<1x32xf32> to vector<16x32xf32>
    %19 = arith.select %14, %16, %18 : vector<16x32xi1>, vector<16x32xf32>
    %c0_4 = arith.constant 0 : index
    %c0_5 = arith.constant 0 : index
    %20 = vector.load %arg3[%c0_4, %c0_5] : memref<16x32xf32, #tpu.memory_space<vmem>>, vector<16x32xf32>
    tpu.vector_store %arg3[%c0_4, %c0_5], %19 {strides = array<i32>} : memref<16x32xf32, #tpu.memory_space<vmem>>, vector<16x32xf32>,
    %cst_6 = arith.constant 1.000000e+00 : f32
    %21 = vector.broadcast %cst_6 : f32 to vector<1x32xf32>
    %22 = arith.extui %12 : vector<16x1xi1> to vector<16x1xi32>
    %23 = arith.sitofp %22 : vector<16x1xi32> to vector<16x1xf32>
    %24 = vector.broadcast %23 : vector<16x1xf32> to vector<16x32xf32>
    %25 = vector.broadcast %21 : vector<1x32xf32> to vector<16x32xf32>
    %26 = arith.mulf %24, %25 : vector<16x32xf32>
    %cst_7 = arith.constant dense<0.000000e+00> : vector<1x16xf32>
    %27 = tpu.matmul %21, %26, %cst_7 {dimension_numbers = #tpu.dot_dimension_numbers<[1], [1], [0], [0], [0, 0, 1, 0], [], []>} : vector<1x32xf32>, vector<16x32xf32>, vector<1x16xf32> -> vector<1x16xf32>
    %cst_8 = arith.constant 5.000000e-01 : f32
    %28 = vector.broadcast %cst_8 : f32 to vector<1x16xf32>
    %29 = arith.cmpf ogt, %27, %28 : vector<1x16xf32>
    %30 = arith.extui %29 : vector<1x16xi1> to vector<1x16xi32>
    %c0_9 = arith.constant 0 : index
    %c0_10 = arith.constant 0 : index
    %c0_11 = arith.constant 0 : index
    %31 = vector.load %arg4[%c0_9, %c0_10, %c0_11] : memref<1x1x16xi32, #tpu.memory_space<vmem>>, vector<1x1x16xi32>
    %32 = vector.shape_cast %31 : vector<1x1x16xi32> to vector<1x16xi32>
    %33 = vector.shape_cast %30 : vector<1x16xi32> to vector<1x1x16xi32>
    tpu.vector_store %arg4[%c0_9, %c0_10, %c0_11], %33 {strides = array<i32>} : memref<1x1x16xi32, #tpu.memory_space<vmem>>, vector<1x1x16xi32>,
    return
  }
  func.func @transform_0(%arg0: i32) -> (i32, i32) {
    %c0_i32 = arith.constant 0 : i32
    %c0_i32_0 = arith.constant 0 : i32
    return %arg0, %c0_i32 : i32, i32
  }
  func.func @transform_1(%arg0: i32) -> (i32, i32) {
    %c0_i32 = arith.constant 0 : i32
    %c0_i32_0 = arith.constant 0 : i32
    %c0_i32_1 = arith.constant 0 : i32
    return %c0_i32, %c0_i32_0 : i32, i32
  }
  func.func @transform_2(%arg0: i32) -> (i32, i32) {
    %c0_i32 = arith.constant 0 : i32
    %c0_i32_0 = arith.constant 0 : i32
    return %arg0, %c0_i32 : i32, i32
  }
  func.func @transform_3(%arg0: i32) -> (i32, i32, i32) {
    %c0_i32 = arith.constant 0 : i32
    %c0_i32_0 = arith.constant 0 : i32
    %c0_i32_1 = arith.constant 0 : i32
    return %arg0, %c0_i32, %c0_i32_0 : i32, i32, i32
  }
}

</mosaic_0001>

<llo_original>
// kernel: qbit_layer_forward.1
$region0: #{qbit_layer_forward.1}
  #allocation0 [shape = 'u32[]', space=smem, size = 0x4, offset = 0x4, fixed_abs, tag = 'smem constant byte address 0x4 - core index']
  #allocation1 [shape = 'u32[72,128]{1,0:T(1,128)}', space=vmem, size = 0x9000, scoped, tag = 'internal scratch']
  %s0 = inlined_call_operand.hbm [shape: f32[16,32], index: 0, kind: input, shape index: {}]
  %s1 = inlined_call_operand.vmem [shape: f32[2,32], index: 1, kind: input, shape index: {}]
  %s2 = inlined_call_operand.hbm [shape: f32[16,32], index: 2, kind: output, shape index: {0}]
  %s3 = inlined_call_operand.vmem [shape: s32[1,1,16], index: 3, kind: output, shape index: {1}]
  %4 = xla_tuple %s2, %s3
  %s5 = sld [smem:[#allocation0]]
  $region30: #{qbit_layer_forward.1} parent=0
    _
  %s7 = ssub.s32 1, %s5
  %s8 = scalar_select 0, %s7, %s5
  $region1: #{qbit_layer_forward.1} parent=0
    #allocation2 [shape = 'u8[8192]{0}', space=vmem, size = 0x2000, scoped, tag = 'input window, operand 0, single buffered']
    #allocation3 [shape = 's32[1]{0}', space=sflag, size = 0x4, scoped, tag = 'scoped memory for qbit_layer_forward.1']
    #allocation4 [shape = 's32[1]{0}', space=sflag, size = 0x4, scoped, tag = 'scoped memory for qbit_layer_forward.1']
    #allocation5 [shape = 'u8[8192]{0}', space=vmem, size = 0x2000, scoped, tag = 'output window, operand 0, single buffered']
    %9 = vsyncpa [#allocation3], 0
    %10 = vsyncpa [#allocation4], 0
    // Predicated region
    $region2: #{qbit_layer_forward.1} parent=1 // pred_check
      _
    $region3: #{qbit_layer_forward.1} parent=1 // pred_check_branch
      %12 = sbr.rel (0) target = $region5
    $region4: #{qbit_layer_forward.1} parent=1 // pred_region
      %14 = vsyncadd [#allocation3], 0
      %s15 = sshll.u32 %s0, 4
      %s16 = int_to_ptr.hbm [resolvable:$true] %s15
      %s17 = sshll.u32 [#allocation2], 4
      %s18 = int_to_ptr.vmem [resolvable:$true] %s17
      %23 = dma.hbm_to_vmem [thread:$0]  %s16, 256, %s18, [#allocation3], 128, 128, 8
    $region5: #{qbit_layer_forward.1} parent=1 // pred_fallthru
      _
    // Predicated region
    $region6: #{qbit_layer_forward.1} parent=1 // pred_check
      _
    $region7: #{qbit_layer_forward.1} parent=1 // pred_check_branch
      %25 = sbr.rel (0) target = $region9
    $region8: #{qbit_layer_forward.1} parent=1 // pred_region
      _
    $region9: #{qbit_layer_forward.1} parent=1 // pred_fallthru
      _
    // Predicated region
    $region10: #{qbit_layer_forward.1} parent=1 // pred_check
      _
    $region11: #{qbit_layer_forward.1} parent=1 // pred_check_branch
      %27 = sbr.rel (0) target = $region13
    $region12: #{qbit_layer_forward.1} parent=1 // pred_region
      %29 = dma.done [#allocation3], 256
    $region13: #{qbit_layer_forward.1} parent=1 // pred_fallthru
      _
    %v30 = vld [vmem:[#allocation2] sm:$0xff]
    %v31 = vld [vmem:[#allocation2 + $0x8] sm:$0xff]
    %v32 = vld [vmem:[%s1] sm:$0x3]
    %v33 = vperm.slane %v32, 0
    %v34 = vmul.f32 %v30, %v33
    %v35 = vmul.f32 %v31, %v33
    %vm36 = vcmask 261120
    %v37 = vsel %vm36, %v34, 0.0
    %38 = vadd.xlane.f32.xlu0 %v37
    %v39 = vpop.xlane.xlu0 %38
    %v40 = vsel %vm36, %v35, 0.0
    %41 = vadd.xlane.f32.xlu0 %v40
    %v42 = vpop.xlane.xlu0 %41
    %v43 = vperm.slane %v32, 1
    %v44 = vmul.f32 %v30, %v43
    %v45 = vmul.f32 %v31, %v43
    %v46 = vsel %vm36, %v44, 0.0
    %47 = vadd.xlane.f32.xlu0 %v46
    %v48 = vpop.xlane.xlu0 %47
    %v49 = vsel %vm36, %v45, 0.0
    %50 = vadd.xlane.f32.xlu0 %v49
    %v51 = vpop.xlane.xlu0 %50
    %vm52 = vcmp.gt.f32.partialorder %v48, %v39
    %vm53 = vcmp.gt.f32.partialorder %v51, %v42
    %v54 = vsel %vm52, 1, 0
    %v55 = vsel %vm53, 1, 0
    %vm56 = vcmp.eq.s32.totalorder %v54, 1
    %vm57 = vcmp.eq.s32.totalorder %v55, 1
    %v58 = vsel %vm56, %v43, %v33
    %v59 = vsel %vm57, %v43, %v33
    %60 = vst.msk [vmem:[#allocation5] sm:$0xff] %vm36, %v58
    %61 = vst.msk [vmem:[#allocation5 + $0x8] sm:$0xff] %vm36, %v59
    %v62 = vcvt.s32.f32 %v54
    %v63 = vcvt.s32.f32 %v55
    %v65 = vsel %vm36, 1.0, 0
    %v68 = vsel %vm36, %v62, 0
    %v71 = vsel %vm36, %v63, 0
    %73 = vmatpush.xpose.msra.mxu0 0.0
    %74 = vmatpush.xpose.msra.mxu0 0.0
    %75 = vmatpush.xpose.msra.mxu0 0.0
    %76 = vmatpush.xpose.msra.mxu0 0.0
    %77 = vmatpush.xpose.msra.mxu0 0.0
    %78 = vmatpush.xpose.msra.mxu0 0.0
    %79 = vmatpush.xpose.msra.mxu0 0.0
    %80 = vmatpush.xpose.msra.mxu0 0.0
    %81 = vmatpush.xpose.msra.mxu0 0.0
    %82 = vmatpush.xpose.msra.mxu0 0.0
    %83 = vmatpush.xpose.msra.mxu0 0.0
    %84 = vmatpush.xpose.msra.mxu0 0.0
    %85 = vmatpush.xpose.msra.mxu0 0.0
    %86 = vmatpush.xpose.msra.mxu0 0.0
    %87 = vmatpush.xpose.msra.mxu0 %v71
    %88 = vmatpush.xpose.msra.mxu0 %v68
    %89 = vmatmul.f32.gmra.mxu0 %v65
    %v90 = vpop.f32.mrf.mxu0
    %v91 = vadd.f32 0.0, %v90
    %92 = vdwg.mxu0
    %vm93 = vcmp.gt.f32.partialorder %v91, 0.5
    %v94 = vsel %vm93, 1, 0
    %vm95 = vcmask 122880
    %96 = vst.msk [vmem:[%s3] sm:$0x1] %vm95, %v94
    // Predicated region
    $region14: #{qbit_layer_forward.1} parent=1 // pred_check
      _
    $region15: #{qbit_layer_forward.1} parent=1 // pred_check_branch
      %98 = sbr.rel (0) target = $region17
    $region16: #{qbit_layer_forward.1} parent=1 // pred_region
      %100 = vsyncadd [#allocation4], 0
      %s101 = sshll.u32 [#allocation5], 4
      %s102 = int_to_ptr.vmem [resolvable:$true] %s101
      %s103 = sshll.u32 %s2, 4
      %s104 = int_to_ptr.hbm [resolvable:$true] %s103
      %109 = dma.vmem_to_hbm [thread:$0]  %s102, 256, %s104, [#allocation4], 128, 128, 8
    $region17: #{qbit_layer_forward.1} parent=1 // pred_fallthru
      _
    // Predicated region
    $region18: #{qbit_layer_forward.1} parent=1 // pred_check
      _
    $region19: #{qbit_layer_forward.1} parent=1 // pred_check_branch
      %111 = sbr.rel (0) target = $region21
    $region20: #{qbit_layer_forward.1} parent=1 // pred_region
      _
    $region21: #{qbit_layer_forward.1} parent=1 // pred_fallthru
      _
    // Predicated region
    $region22: #{qbit_layer_forward.1} parent=1 // pred_check
      _
    $region23: #{qbit_layer_forward.1} parent=1 // pred_check_branch
      %113 = sbr.rel (0) target = $region25
    $region24: #{qbit_layer_forward.1} parent=1 // pred_region
      %115 = dma.done [#allocation4], 256
    $region25: #{qbit_layer_forward.1} parent=1 // pred_fallthru
      _
    // Predicated region
    $region26: #{qbit_layer_forward.1} parent=1 // pred_check
      _
    $region27: #{qbit_layer_forward.1} parent=1 // pred_check_branch
      %117 = sbr.rel (0) target = $region29
    $region28: #{qbit_layer_forward.1} parent=1 // pred_region
      _
    $region29: #{qbit_layer_forward.1} parent=1 // pred_fallthru
      _
    %118 = vsyncpa [#allocation3], 1
    %119 = vsyncpa [#allocation4], 1

</llo_original>
